<compile_context>
chip_gen: v7x
topology: tpu7x:2x2x1
jax: 0.10.0
libtpu: 0.0.40
codegen_flags: <defaults>
</compile_context>

<pallas_src>
import jax
import jax.numpy as jnp
from jax.experimental import pallas as pl
from jax.experimental.pallas import tpu as pltpu


def _round_up(a, b):
    return (a + b - 1) // b * b


def _make_focal_mse_kernel(gamma, n_valid, block_rows, cols, inv_n, need_mask):
    """Fused ((x - t)^2)^gamma mean-reduction kernel."""

    def kernel(x_ref, t_ref, o_ref, acc_ref):
        i = pl.program_id(0)

        @pl.when(i == 0)
        def _init():
            acc_ref[...] = jnp.zeros_like(acc_ref)

        d = x_ref[...] - t_ref[...]
        sq = d * d
        # Static python branches: only the selected path is traced.
        if gamma == 2:
            sq = sq * sq
        elif gamma != 1:
            sq = sq ** jnp.float32(gamma)

        if need_mask:
            # Only needed for gamma <= 0 where padded zeros would not map to 0.
            row = jax.lax.broadcasted_iota(jnp.int32, (block_rows, cols), 0)
            col = jax.lax.broadcasted_iota(jnp.int32, (block_rows, cols), 1)
            flat = (i * block_rows + row) * cols + col
            sq = jnp.where(flat < n_valid, sq, 0.0)

        acc_ref[...] += jnp.sum(sq, axis=(0, 1), keepdims=True)

        @pl.when(i == pl.num_programs(0) - 1)
        def _finalize():
            o_ref[...] = acc_ref[...] * jnp.float32(inv_n)

    return kernel


def depth_focal_loss(x, target, gamma=1.0, eps=1e-7):
    """Pallas equivalent of DepthFocalLoss.forward (eps kept for signature parity)."""
    assert x.shape == target.shape, (x.shape, target.shape)
    n = int(x.size)

    xf = jnp.ravel(x).astype(jnp.float32)
    tf = jnp.ravel(target).astype(jnp.float32)

    # Lane-dense 2-D layout: cols multiple of 128, rows multiple of 8.
    cols = 512 if n >= 4096 else 128
    rows = _round_up(pl.cdiv(n, cols), 8)
    block_rows = min(512, rows)
    rows = _round_up(rows, block_rows)
    padded = rows * cols

    if padded != n:
        # Pad both operands with zeros -> (0-0)^2 = 0 contributes nothing
        # for any gamma > 0; mask handles the pathological gamma <= 0 case.
        xf = jnp.pad(xf, (0, padded - n))
        tf = jnp.pad(tf, (0, padded - n))
    x2 = xf.reshape(rows, cols)
    t2 = tf.reshape(rows, cols)

    grid = (rows // block_rows,)
    kernel = _make_focal_mse_kernel(
        gamma=gamma,
        n_valid=n,
        block_rows=block_rows,
        cols=cols,
        inv_n=1.0 / float(n),
        need_mask=(padded != n) and (gamma <= 0),
    )

    tile_spec = pl.BlockSpec((block_rows, cols), lambda i: (i, 0))
    out = pl.pallas_call(
        kernel,
        out_shape=jax.ShapeDtypeStruct((1, 1), jnp.float32),
        grid=grid,
        in_specs=[tile_spec, tile_spec],
        out_specs=pl.BlockSpec((1, 1), lambda i: (0, 0)),
        scratch_shapes=[pltpu.VMEM((1, 1), jnp.float32)],
        compiler_params=pltpu.CompilerParams(
            dimension_semantics=("arbitrary",)),   # reduction axis
        cost_estimate=pl.CostEstimate(
            flops=3 * padded, transcendentals=0,
            bytes_accessed=2 * padded * 4 + 4),
    )(x2, t2)
    return out[0, 0]


if __name__ == "__main__":
    key = jax.random.PRNGKey(0)
    kx, kt = jax.random.split(key)

    # Small depth-map-like shapes: (batch=2, channels=4, H=16, W=16)
    x = jax.random.normal(kx, (2, 4, 16, 16), dtype=jnp.float32)
    t = jax.random.normal(kt, (2, 4, 16, 16), dtype=jnp.float32)

    loss_g1 = jax.jit(lambda a, b: depth_focal_loss(a, b, gamma=1.0))
    loss_g2 = jax.jit(lambda a, b: depth_focal_loss(a, b, gamma=2.0))

    out1 = loss_g1(x, t)
    out2 = loss_g2(x, t)
    jax.block_until_ready((out1, out2))

    ref1 = jnp.mean((x - t) ** 2)
    ref2 = jnp.mean(((x - t) ** 2) ** 2.0)

    assert out1.shape == (), out1.shape
    assert bool(jnp.isfinite(out1)) and bool(jnp.isfinite(out2))
    assert abs(float(out1) - float(ref1)) < 1e-5 * max(1.0, abs(float(ref1)))
    assert abs(float(out2) - float(ref2)) < 1e-5 * max(1.0, abs(float(ref2)))
    print("KERNEL_OK")
</pallas_src>

<mosaic_0001>
module attributes {stable_mosaic.version = 11 : i64} {
  func.func @kernel(%arg0: i32, %arg1: memref<16x128xf32, #tpu.memory_space<vmem>>, %arg2: memref<16x128xf32, #tpu.memory_space<vmem>>, %arg3: memref<1x1xf32, #tpu.memory_space<vmem>>, %arg4: memref<1x1xf32, #tpu.memory_space<vmem>>) attributes {dimension_semantics = [#tpu.dimension_semantics<arbitrary>], iteration_bounds = array<i64: 1>, scalar_prefetch = 0 : i64, scratch_operands = 1 : i64, tpu.core_type = #tpu.core_type<tc>, window_params = [{transform_indices = @transform_0, window_bounds = array<i64: 16, 128>}, {transform_indices = @transform_1, window_bounds = array<i64: 16, 128>}, {pipeline_mode = #tpu.pipeline_mode<synchronous>, transform_indices = @transform_2, window_bounds = array<i64: 1, 1>}]} {
    %c0_i32 = arith.constant 0 : i32
    %0 = arith.cmpi eq, %arg0, %c0_i32 : i32
    %1 = arith.extui %0 : i1 to i32
    %c0_i32_0 = arith.constant 0 : i32
    %2 = arith.cmpi ne, %1, %c0_i32_0 : i32
    scf.if %2 {
      %cst_10 = arith.constant 0.000000e+00 : f32
      %18 = vector.broadcast %cst_10 : f32 to vector<1x1xf32>
      %c0_11 = arith.constant 0 : index
      %c0_12 = arith.constant 0 : index
      %19 = vector.load %arg4[%c0_11, %c0_12] : memref<1x1xf32, #tpu.memory_space<vmem>>, vector<1x1xf32>
      tpu.vector_store %arg4[%c0_11, %c0_12], %18 {strides = array<i32>} : memref<1x1xf32, #tpu.memory_space<vmem>>, vector<1x1xf32>,
    } else {
    }
    %c0 = arith.constant 0 : index
    %c0_1 = arith.constant 0 : index
    %3 = vector.load %arg1[%c0, %c0_1] : memref<16x128xf32, #tpu.memory_space<vmem>>, vector<16x128xf32>
    %c0_2 = arith.constant 0 : index
    %c0_3 = arith.constant 0 : index
    %4 = vector.load %arg2[%c0_2, %c0_3] : memref<16x128xf32, #tpu.memory_space<vmem>>, vector<16x128xf32>
    %5 = arith.subf %3, %4 : vector<16x128xf32>
    %6 = arith.mulf %5, %5 : vector<16x128xf32>
    %c0_4 = arith.constant 0 : index
    %c0_5 = arith.constant 0 : index
    %7 = vector.load %arg4[%c0_4, %c0_5] : memref<1x1xf32, #tpu.memory_space<vmem>>, vector<1x1xf32>
    %8 = vector.shape_cast %6 : vector<16x128xf32> to vector<1x16x128xf32>
    %cst = arith.constant dense<0.000000e+00> : vector<1xf32>
    %9 = vector.multi_reduction <add>, %8, %cst [1, 2] : vector<1x16x128xf32> to vector<1xf32>
    %10 = vector.shape_cast %9 : vector<1xf32> to vector<1x1x1xf32>
    %11 = vector.extract %10[0, 0, 0] : f32 from vector<1x1x1xf32>
    %12 = vector.broadcast %11 : f32 to vector<1x1xf32>
    %13 = arith.addf %7, %12 : vector<1x1xf32>
    %c0_6 = arith.constant 0 : index
    %c0_7 = arith.constant 0 : index
    %14 = vector.load %arg4[%c0_6, %c0_7] : memref<1x1xf32, #tpu.memory_space<vmem>>, vector<1x1xf32>
    tpu.vector_store %arg4[%c0_6, %c0_7], %13 {strides = array<i32>} : memref<1x1xf32, #tpu.memory_space<vmem>>, vector<1x1xf32>,
    %c0_i32_8 = arith.constant 0 : i32
    %15 = arith.cmpi eq, %arg0, %c0_i32_8 : i32
    %16 = arith.extui %15 : i1 to i32
    %c0_i32_9 = arith.constant 0 : i32
    %17 = arith.cmpi ne, %16, %c0_i32_9 : i32
    scf.if %17 {
      %c0_10 = arith.constant 0 : index
      %c0_11 = arith.constant 0 : index
      %18 = vector.load %arg4[%c0_10, %c0_11] : memref<1x1xf32, #tpu.memory_space<vmem>>, vector<1x1xf32>
      %cst_12 = arith.constant 4.8828125E-4 : f32
      %19 = vector.broadcast %cst_12 : f32 to vector<1x1xf32>
      %20 = arith.mulf %18, %19 : vector<1x1xf32>
      %c0_13 = arith.constant 0 : index
      %c0_14 = arith.constant 0 : index
      %21 = vector.load %arg3[%c0_13, %c0_14] : memref<1x1xf32, #tpu.memory_space<vmem>>, vector<1x1xf32>
      tpu.vector_store %arg3[%c0_13, %c0_14], %20 {strides = array<i32>} : memref<1x1xf32, #tpu.memory_space<vmem>>, vector<1x1xf32>,
    } else {
    }
    return
  }
  func.func @transform_0(%arg0: i32) -> (i32, i32) {
    %c0_i32 = arith.constant 0 : i32
    %c0_i32_0 = arith.constant 0 : i32
    return %arg0, %c0_i32 : i32, i32
  }
  func.func @transform_1(%arg0: i32) -> (i32, i32) {
    %c0_i32 = arith.constant 0 : i32
    %c0_i32_0 = arith.constant 0 : i32
    return %arg0, %c0_i32 : i32, i32
  }
  func.func @transform_2(%arg0: i32) -> (i32, i32) {
    %c0_i32 = arith.constant 0 : i32
    %c0_i32_0 = arith.constant 0 : i32
    %c0_i32_1 = arith.constant 0 : i32
    return %c0_i32, %c0_i32_0 : i32, i32
  }
}

</mosaic_0001>

<llo_original>
// kernel: _lambda_.1
$region0: #{_lambda_.1}
  #allocation0 [shape = 'u32[]', space=smem, size = 0x4, offset = 0x4, fixed_abs, tag = 'smem constant byte address 0x4 - core index']
  #allocation1 [shape = 'u32[144,128]{1,0:T(1,128)}', space=vmem, size = 0x12000, scoped, tag = 'internal scratch']
  #allocation2 [shape = 'f32[1,1]{1,0:T(1,128)}', space=vmem, size = 0x200, scoped, tag = 'scratch operand']
  %s0 = inlined_call_operand.vmem [shape: f32[16,128], index: 0, kind: input, shape index: {}]
  %s1 = inlined_call_operand.vmem [shape: f32[16,128], index: 1, kind: input, shape index: {}]
  %s2 = inlined_call_operand.hbm [shape: f32[1,1], index: 2, kind: output, shape index: {}]
  %s3 = sld [smem:[#allocation0]]
  $region26: #{_lambda_.1} parent=0
    _
  %s5 = ssub.s32 1, %s3
  %s6 = scalar_select 0, %s5, %s3
  $region1: #{_lambda_.1} parent=0
    #allocation3 [shape = 'u8[512]{0}', space=vmem, size = 0x400, scoped, tag = 'output window, operand 0, single buffered']
    #allocation4 [shape = 's32[1]{0}', space=sflag, size = 0x4, scoped, tag = 'scoped memory for _lambda_.1']
    %7 = vsyncpa [#allocation4], 0
    // Predicated region
    $region2: #{_lambda_.1} parent=1 // pred_check
      _
    $region3: #{_lambda_.1} parent=1 // pred_check_branch
      %9 = sbr.rel (0) target = $region5
    $region4: #{_lambda_.1} parent=1 // pred_region
      _
    $region5: #{_lambda_.1} parent=1 // pred_fallthru
      _
    // Predicated region
    $region6: #{_lambda_.1} parent=1 // pred_check
      _
    $region7: #{_lambda_.1} parent=1 // pred_check_branch
      %11 = sbr.rel (0) target = $region9
    $region8: #{_lambda_.1} parent=1 // pred_region
      _
    $region9: #{_lambda_.1} parent=1 // pred_fallthru
      _
    %p12 = scmp.eq.s32.totalorder 0, 0
    // Predicated region
    $region10: #{_lambda_.1} parent=1 // pred_check
      %p13 = pneg %p12
    $region11: #{_lambda_.1} parent=1 // pred_check_branch
      %15 = sbr.rel (%p13) target = $region13
    $region12: #{_lambda_.1} parent=1 // pred_region
      %vm16 = vcmask 0
      %17 = vst.msk [vmem:[#allocation2] sm:$0x1] %vm16, 0.0
    $region13: #{_lambda_.1} parent=1 // pred_fallthru
      _
    %v18 = vld [vmem:[%s0] sm:$0xff]
    %v19 = vld [vmem:[%s0 + $0x8] sm:$0xff]
    %v20 = vld [vmem:[%s1] sm:$0xff]
    %v21 = vld [vmem:[%s1 + $0x8] sm:$0xff]
    %v22 = vsub.f32 %v18, %v20
    %v23 = vsub.f32 %v19, %v21
    %v24 = vmul.f32 %v22, %v22
    %v25 = vmul.f32 %v23, %v23
    %v26 = vld [vmem:[#allocation2] sm:$0x1]
    %v27 = vadd.f32 %v24, %v25
    %28 = vadd.xlane.f32.xlu0 %v27
    %v29 = vpop.xlane.xlu0 %28
    %v30 = vrot.slane %v29, 4
    %v31 = vadd.f32 %v29, %v30
    %v32 = vrot.slane %v31, 2
    %v33 = vadd.f32 %v31, %v32
    %v34 = vrot.slane %v33, 1
    %v35 = vadd.f32 %v33, %v34
    %s36 = vtos %v35
    %v37 = vstv %s36
    %v38 = vadd.f32 %v26, %v37
    %vm39 = vcmask 0
    %40 = vst.msk [vmem:[#allocation2] sm:$0x1] %vm39, %v38
    // Predicated region
    $region14: #{_lambda_.1} parent=1 // pred_check
      %p41 = pneg %p12
    $region15: #{_lambda_.1} parent=1 // pred_check_branch
      %43 = sbr.rel (%p41) target = $region17
    $region16: #{_lambda_.1} parent=1 // pred_region
      %v44 = vld [vmem:[#allocation2] sm:$0x1]
      %v45 = vmul.f32 %v44, 0.00048828125
      %46 = vst.msk [vmem:[#allocation3] sm:$0x1] %vm39, %v45
    $region17: #{_lambda_.1} parent=1 // pred_fallthru
      _
    // Predicated region
    $region18: #{_lambda_.1} parent=1 // pred_check
      _
    $region19: #{_lambda_.1} parent=1 // pred_check_branch
      %48 = sbr.rel (0) target = $region21
    $region20: #{_lambda_.1} parent=1 // pred_region
      %s50 = ssub.s32 16, 16
      %51 = vsyncadd [#allocation4], %s50
      %s53 = sshll.u32 [#allocation3], 4
      %s54 = int_to_ptr.vmem [resolvable:$true] %s53
      %56 = dma.vmem_to_hbm [thread:$0]  %s54, 16, %s2, [#allocation4]
    $region21: #{_lambda_.1} parent=1 // pred_fallthru
      _
    // Predicated region
    $region22: #{_lambda_.1} parent=1 // pred_check
      _
    $region23: #{_lambda_.1} parent=1 // pred_check_branch
      %58 = sbr.rel (0) target = $region25
    $region24: #{_lambda_.1} parent=1 // pred_region
      %59 = dma.done [#allocation4], 16
    $region25: #{_lambda_.1} parent=1 // pred_fallthru
      _
    %60 = vsyncpa [#allocation4], 1

</llo_original>
